<compile_context>
chip_gen: v7x
topology: tpu7x:2x2x1
jax: 0.10.0
libtpu: 0.0.40
codegen_flags: <defaults>
</compile_context>

<pallas_src>
import functools

import jax
import jax.numpy as jnp
from jax.experimental import pallas as pl
from jax.experimental.pallas import tpu as pltpu

INPUT_DIM = 3
OUTPUT_DIM = 3
HIDDEN_DIM = 128
LANE = 128           # pad only the final weight/bias to one full lane group
TILE_N = 1024        # points per grid step (multiple of 256 for v6e/v7x MXU)


def _round_up(n, m):
    return ((n + m - 1) // m) * m


def _mlp_kernel(x_ref, w1_ref, b1_ref, w2_ref, b2_ref, w3_ref, b3_ref,
                w4_ref, b4_ref, o_ref):
    """Fused 4-layer MLP (3 hidden ReLU layers) on one tile of points."""
    x = x_ref[...].astype(jnp.float32)          # (tile_n, 3)
    w1 = w1_ref[...]                            # (3, 128) f32

    # ---- Layer 1 on the VPU: 3 broadcast-FMAs (no padded MXU pass) ---------
    h = (x[:, 0:1] * w1[0:1, :]
         + x[:, 1:2] * w1[1:2, :]
         + x[:, 2:3] * w1[2:3, :]
         + b1_ref[...])
    h = jnp.maximum(h, 0.0)

    # ---- Hidden layers on the MXU: bf16 operands, f32 accumulation ---------
    h = jnp.dot(h.astype(jnp.bfloat16), w2_ref[...],
                preferred_element_type=jnp.float32) + b2_ref[...]
    h = jnp.maximum(h, 0.0)

    h = jnp.dot(h.astype(jnp.bfloat16), w3_ref[...],
                preferred_element_type=jnp.float32) + b3_ref[...]
    h = jnp.maximum(h, 0.0)

    out = jnp.dot(h.astype(jnp.bfloat16), w4_ref[...],
                  preferred_element_type=jnp.float32) + b4_ref[...]

    # Narrow (tile_n, 3) store straight to the unpadded output.
    o_ref[...] = out[:, :OUTPUT_DIM].astype(o_ref.dtype)


@functools.partial(jax.jit, static_argnames=("tile_n",))
def point_mlp_1frame(x, params, *, tile_n=TILE_N):
    """x: [..., INPUT_DIM] float32 -> [..., OUTPUT_DIM] float32."""
    (w1, b1), (w2, b2), (w3, b3), (w4, b4) = params
    lead_shape = x.shape[:-1]
    d_in = x.shape[-1]
    assert d_in == INPUT_DIM

    # Flatten leading dims; pad the point count to a multiple of the tile.
    x2d = x.reshape(-1, d_in)
    n = x2d.shape[0]
    eff_tile = min(tile_n, _round_up(max(n, 8), 8))
    n_pad = _round_up(n, eff_tile)
    if n_pad != n:
        x2d = jnp.pad(x2d, ((0, n_pad - n), (0, 0)))

    # ---- parameter prep (tiny, resident weights) ---------------------------
    w2b = w2.astype(jnp.bfloat16)
    w3b = w3.astype(jnp.bfloat16)
    # Only the final layer's weight/bias get padded to 128 lanes (~32 KiB).
    w4_pad = jnp.zeros((HIDDEN_DIM, LANE), jnp.bfloat16).at[:, :OUTPUT_DIM].set(
        w4.astype(jnp.bfloat16))
    b4_pad = jnp.zeros((1, LANE), jnp.float32).at[:, :OUTPUT_DIM].set(
        b4.reshape(1, -1).astype(jnp.float32))
    b1_2d = b1.reshape(1, -1).astype(jnp.float32)
    b2_2d = b2.reshape(1, -1).astype(jnp.float32)
    b3_2d = b3.reshape(1, -1).astype(jnp.float32)
    w1_f32 = w1.astype(jnp.float32)

    full = lambda r, c: pl.BlockSpec((r, c), lambda i: (0, 0))

    out2d = pl.pallas_call(
        _mlp_kernel,
        out_shape=jax.ShapeDtypeStruct((n_pad, OUTPUT_DIM), x.dtype),
        grid_spec=pltpu.PrefetchScalarGridSpec(
            num_scalar_prefetch=0,
            grid=(n_pad // eff_tile,),
            in_specs=[
                pl.BlockSpec((eff_tile, INPUT_DIM), lambda i: (i, 0)),  # x
                full(INPUT_DIM, HIDDEN_DIM),    # w1 (3, 128) f32
                full(1, HIDDEN_DIM),            # b1
                full(HIDDEN_DIM, HIDDEN_DIM),   # w2 bf16
                full(1, HIDDEN_DIM),            # b2
                full(HIDDEN_DIM, HIDDEN_DIM),   # w3 bf16
                full(1, HIDDEN_DIM),            # b3
                full(HIDDEN_DIM, LANE),         # w4 bf16 (padded cols)
                full(1, LANE),                  # b4 (padded)
            ],
            out_specs=pl.BlockSpec((eff_tile, OUTPUT_DIM), lambda i: (i, 0)),
        ),
        compiler_params=pltpu.CompilerParams(
            dimension_semantics=("parallel",)),
    )(x2d, w1_f32, b1_2d, w2b, b2_2d, w3b, b3_2d, w4_pad, b4_pad)

    out = out2d[:n]
    return out.reshape(*lead_shape, OUTPUT_DIM)


def init_params(key):
    """Deterministic init matching the nn.Linear shapes (fan_in uniform)."""
    dims = [(INPUT_DIM, HIDDEN_DIM), (HIDDEN_DIM, HIDDEN_DIM),
            (HIDDEN_DIM, HIDDEN_DIM), (HIDDEN_DIM, OUTPUT_DIM)]
    params = []
    for (fan_in, fan_out) in dims:
        key, kw, kb = jax.random.split(key, 3)
        bound = 1.0 / (fan_in ** 0.5)
        # stored as [in, out] so the kernel does x @ W (== x @ W_torch.T)
        w = jax.random.uniform(kw, (fan_in, fan_out), jnp.float32, -bound, bound)
        b = jax.random.uniform(kb, (fan_out,), jnp.float32, -bound, bound)
        params.append((w, b))
    return params


def _reference(x, params):
    h = x
    for i, (w, b) in enumerate(params):
        h = h @ w + b
        if i < len(params) - 1:
            h = jnp.maximum(h, 0.0)
    return h


if __name__ == "__main__":
    key = jax.random.PRNGKey(0)
    kx, kp = jax.random.split(key)

    # Small shapes; exercise leading dims and the N-padding path.
    x = jax.random.normal(kx, (2, 100, INPUT_DIM), dtype=jnp.float32)
    params = init_params(kp)

    out = point_mlp_1frame(x, params)
    out = jax.block_until_ready(out)

    ref = _reference(x.reshape(-1, INPUT_DIM), params).reshape(2, 100, OUTPUT_DIM)
    assert out.shape == (2, 100, OUTPUT_DIM)
    # bf16 MXU operands with f32 accumulation -> loosened tolerance vs f32 ref.
    assert jnp.allclose(out, ref, atol=5e-2, rtol=5e-2), (
        "mismatch vs JAX reference; max abs err = "
        f"{jnp.max(jnp.abs(out - ref))}")

    print("KERNEL_OK")
</pallas_src>

<mosaic_0001>
module attributes {stable_mosaic.version = 11 : i64} {
  func.func @_mlp_kernel(%arg0: i32, %arg1: memref<200x3xf32, #tpu.memory_space<vmem>>, %arg2: memref<3x128xf32, #tpu.memory_space<vmem>>, %arg3: memref<1x128xf32, #tpu.memory_space<vmem>>, %arg4: memref<128x128xbf16, #tpu.memory_space<vmem>>, %arg5: memref<1x128xf32, #tpu.memory_space<vmem>>, %arg6: memref<128x128xbf16, #tpu.memory_space<vmem>>, %arg7: memref<1x128xf32, #tpu.memory_space<vmem>>, %arg8: memref<128x128xbf16, #tpu.memory_space<vmem>>, %arg9: memref<1x128xf32, #tpu.memory_space<vmem>>, %arg10: memref<200x3xf32, #tpu.memory_space<vmem>>) attributes {dimension_semantics = [#tpu.dimension_semantics<parallel>], iteration_bounds = array<i64: 1>, scalar_prefetch = 0 : i64, scratch_operands = 0 : i64, tpu.core_type = #tpu.core_type<tc>, window_params = [{transform_indices = @transform_0, window_bounds = array<i64: 200, 3>}, {pipeline_mode = #tpu.pipeline_mode<synchronous>, transform_indices = @transform_1, window_bounds = array<i64: 3, 128>}, {pipeline_mode = #tpu.pipeline_mode<synchronous>, transform_indices = @transform_2, window_bounds = array<i64: 1, 128>}, {pipeline_mode = #tpu.pipeline_mode<synchronous>, transform_indices = @transform_3, window_bounds = array<i64: 128, 128>}, {pipeline_mode = #tpu.pipeline_mode<synchronous>, transform_indices = @transform_4, window_bounds = array<i64: 1, 128>}, {pipeline_mode = #tpu.pipeline_mode<synchronous>, transform_indices = @transform_5, window_bounds = array<i64: 128, 128>}, {pipeline_mode = #tpu.pipeline_mode<synchronous>, transform_indices = @transform_6, window_bounds = array<i64: 1, 128>}, {pipeline_mode = #tpu.pipeline_mode<synchronous>, transform_indices = @transform_7, window_bounds = array<i64: 128, 128>}, {pipeline_mode = #tpu.pipeline_mode<synchronous>, transform_indices = @transform_8, window_bounds = array<i64: 1, 128>}, {transform_indices = @transform_9, window_bounds = array<i64: 200, 3>}]} {
    %c0 = arith.constant 0 : index
    %c0_0 = arith.constant 0 : index
    %0 = vector.load %arg1[%c0, %c0_0] : memref<200x3xf32, #tpu.memory_space<vmem>>, vector<200x3xf32>
    %c0_1 = arith.constant 0 : index
    %c0_2 = arith.constant 0 : index
    %1 = vector.load %arg2[%c0_1, %c0_2] : memref<3x128xf32, #tpu.memory_space<vmem>>, vector<3x128xf32>
    %2 = vector.extract_strided_slice %0 {offsets = [0, 0], sizes = [200, 1], strides = [1, 1]} : vector<200x3xf32> to vector<200x1xf32>
    %3 = vector.extract_strided_slice %1 {offsets = [0, 0], sizes = [1, 128], strides = [1, 1]} : vector<3x128xf32> to vector<1x128xf32>
    %4 = vector.broadcast %2 : vector<200x1xf32> to vector<200x128xf32>
    %5 = vector.broadcast %3 : vector<1x128xf32> to vector<200x128xf32>
    %6 = arith.mulf %4, %5 : vector<200x128xf32>
    %7 = vector.extract_strided_slice %0 {offsets = [0, 1], sizes = [200, 1], strides = [1, 1]} : vector<200x3xf32> to vector<200x1xf32>
    %8 = vector.extract_strided_slice %1 {offsets = [1, 0], sizes = [1, 128], strides = [1, 1]} : vector<3x128xf32> to vector<1x128xf32>
    %9 = vector.broadcast %7 : vector<200x1xf32> to vector<200x128xf32>
    %10 = vector.broadcast %8 : vector<1x128xf32> to vector<200x128xf32>
    %11 = arith.mulf %9, %10 : vector<200x128xf32>
    %12 = arith.addf %6, %11 : vector<200x128xf32>
    %13 = vector.extract_strided_slice %0 {offsets = [0, 2], sizes = [200, 1], strides = [1, 1]} : vector<200x3xf32> to vector<200x1xf32>
    %14 = vector.extract_strided_slice %1 {offsets = [2, 0], sizes = [1, 128], strides = [1, 1]} : vector<3x128xf32> to vector<1x128xf32>
    %15 = vector.broadcast %13 : vector<200x1xf32> to vector<200x128xf32>
    %16 = vector.broadcast %14 : vector<1x128xf32> to vector<200x128xf32>
    %17 = arith.mulf %15, %16 : vector<200x128xf32>
    %18 = arith.addf %12, %17 : vector<200x128xf32>
    %c0_3 = arith.constant 0 : index
    %c0_4 = arith.constant 0 : index
    %19 = vector.load %arg3[%c0_3, %c0_4] : memref<1x128xf32, #tpu.memory_space<vmem>>, vector<1x128xf32>
    %20 = vector.broadcast %19 : vector<1x128xf32> to vector<200x128xf32>
    %21 = arith.addf %18, %20 : vector<200x128xf32>
    %cst = arith.constant 0.000000e+00 : f32
    %22 = vector.broadcast %cst : f32 to vector<200x128xf32>
    %23 = arith.maximumf %21, %22 : vector<200x128xf32>
    %24 = arith.truncf %23 : vector<200x128xf32> to vector<200x128xbf16>
    %c0_5 = arith.constant 0 : index
    %c0_6 = arith.constant 0 : index
    %25 = vector.load %arg4[%c0_5, %c0_6] : memref<128x128xbf16, #tpu.memory_space<vmem>>, vector<128x128xbf16>
    %cst_7 = arith.constant dense<0.000000e+00> : vector<200x128xf32>
    %26 = tpu.matmul %24, %25, %cst_7 {dimension_numbers = #tpu.dot_dimension_numbers<[1], [0], [0], [1], [0, 0, 1, 1], [], []>} : vector<200x128xbf16>, vector<128x128xbf16>, vector<200x128xf32> -> vector<200x128xf32>
    %c0_8 = arith.constant 0 : index
    %c0_9 = arith.constant 0 : index
    %27 = vector.load %arg5[%c0_8, %c0_9] : memref<1x128xf32, #tpu.memory_space<vmem>>, vector<1x128xf32>
    %28 = vector.broadcast %27 : vector<1x128xf32> to vector<200x128xf32>
    %29 = arith.addf %26, %28 : vector<200x128xf32>
    %cst_10 = arith.constant 0.000000e+00 : f32
    %30 = vector.broadcast %cst_10 : f32 to vector<200x128xf32>
    %31 = arith.maximumf %29, %30 : vector<200x128xf32>
    %32 = arith.truncf %31 : vector<200x128xf32> to vector<200x128xbf16>
    %c0_11 = arith.constant 0 : index
    %c0_12 = arith.constant 0 : index
    %33 = vector.load %arg6[%c0_11, %c0_12] : memref<128x128xbf16, #tpu.memory_space<vmem>>, vector<128x128xbf16>
    %cst_13 = arith.constant dense<0.000000e+00> : vector<200x128xf32>
    %34 = tpu.matmul %32, %33, %cst_13 {dimension_numbers = #tpu.dot_dimension_numbers<[1], [0], [0], [1], [0, 0, 1, 1], [], []>} : vector<200x128xbf16>, vector<128x128xbf16>, vector<200x128xf32> -> vector<200x128xf32>
    %c0_14 = arith.constant 0 : index
    %c0_15 = arith.constant 0 : index
    %35 = vector.load %arg7[%c0_14, %c0_15] : memref<1x128xf32, #tpu.memory_space<vmem>>, vector<1x128xf32>
    %36 = vector.broadcast %35 : vector<1x128xf32> to vector<200x128xf32>
    %37 = arith.addf %34, %36 : vector<200x128xf32>
    %cst_16 = arith.constant 0.000000e+00 : f32
    %38 = vector.broadcast %cst_16 : f32 to vector<200x128xf32>
    %39 = arith.maximumf %37, %38 : vector<200x128xf32>
    %40 = arith.truncf %39 : vector<200x128xf32> to vector<200x128xbf16>
    %c0_17 = arith.constant 0 : index
    %c0_18 = arith.constant 0 : index
    %41 = vector.load %arg8[%c0_17, %c0_18] : memref<128x128xbf16, #tpu.memory_space<vmem>>, vector<128x128xbf16>
    %cst_19 = arith.constant dense<0.000000e+00> : vector<200x128xf32>
    %42 = tpu.matmul %40, %41, %cst_19 {dimension_numbers = #tpu.dot_dimension_numbers<[1], [0], [0], [1], [0, 0, 1, 1], [], []>} : vector<200x128xbf16>, vector<128x128xbf16>, vector<200x128xf32> -> vector<200x128xf32>
    %c0_20 = arith.constant 0 : index
    %c0_21 = arith.constant 0 : index
    %43 = vector.load %arg9[%c0_20, %c0_21] : memref<1x128xf32, #tpu.memory_space<vmem>>, vector<1x128xf32>
    %44 = vector.broadcast %43 : vector<1x128xf32> to vector<200x128xf32>
    %45 = arith.addf %42, %44 : vector<200x128xf32>
    %46 = vector.extract_strided_slice %45 {offsets = [0, 0], sizes = [200, 3], strides = [1, 1]} : vector<200x128xf32> to vector<200x3xf32>
    %c0_22 = arith.constant 0 : index
    %c0_23 = arith.constant 0 : index
    %47 = vector.load %arg10[%c0_22, %c0_23] : memref<200x3xf32, #tpu.memory_space<vmem>>, vector<200x3xf32>
    tpu.vector_store %arg10[%c0_22, %c0_23], %46 {strides = array<i32>} : memref<200x3xf32, #tpu.memory_space<vmem>>, vector<200x3xf32>,
    return
  }
  func.func @transform_0(%arg0: i32) -> (i32, i32) {
    %c0_i32 = arith.constant 0 : i32
    %c0_i32_0 = arith.constant 0 : i32
    return %arg0, %c0_i32 : i32, i32
  }
  func.func @transform_1(%arg0: i32) -> (i32, i32) {
    %c0_i32 = arith.constant 0 : i32
    %c0_i32_0 = arith.constant 0 : i32
    %c0_i32_1 = arith.constant 0 : i32
    return %c0_i32, %c0_i32_0 : i32, i32
  }
  func.func @transform_2(%arg0: i32) -> (i32, i32) {
    %c0_i32 = arith.constant 0 : i32
    %c0_i32_0 = arith.constant 0 : i32
    %c0_i32_1 = arith.constant 0 : i32
    return %c0_i32, %c0_i32_0 : i32, i32
  }
  func.func @transform_3(%arg0: i32) -> (i32, i32) {
    %c0_i32 = arith.constant 0 : i32
    %c0_i32_0 = arith.constant 0 : i32
    %c0_i32_1 = arith.constant 0 : i32
    return %c0_i32, %c0_i32_0 : i32, i32
  }
  func.func @transform_4(%arg0: i32) -> (i32, i32) {
    %c0_i32 = arith.constant 0 : i32
    %c0_i32_0 = arith.constant 0 : i32
    %c0_i32_1 = arith.constant 0 : i32
    return %c0_i32, %c0_i32_0 : i32, i32
  }
  func.func @transform_5(%arg0: i32) -> (i32, i32) {
    %c0_i32 = arith.constant 0 : i32
    %c0_i32_0 = arith.constant 0 : i32
    %c0_i32_1 = arith.constant 0 : i32
    return %c0_i32, %c0_i32_0 : i32, i32
  }
  func.func @transform_6(%arg0: i32) -> (i32, i32) {
    %c0_i32 = arith.constant 0 : i32
    %c0_i32_0 = arith.constant 0 : i32
    %c0_i32_1 = arith.constant 0 : i32
    return %c0_i32, %c0_i32_0 : i32, i32
  }
  func.func @transform_7(%arg0: i32) -> (i32, i32) {
    %c0_i32 = arith.constant 0 : i32
    %c0_i32_0 = arith.constant 0 : i32
    %c0_i32_1 = arith.constant 0 : i32
    return %c0_i32, %c0_i32_0 : i32, i32
  }
  func.func @transform_8(%arg0: i32) -> (i32, i32) {
    %c0_i32 = arith.constant 0 : i32
    %c0_i32_0 = arith.constant 0 : i32
    %c0_i32_1 = arith.constant 0 : i32
    return %c0_i32, %c0_i32_0 : i32, i32
  }
  func.func @transform_9(%arg0: i32) -> (i32, i32) {
    %c0_i32 = arith.constant 0 : i32
    %c0_i32_0 = arith.constant 0 : i32
    return %arg0, %c0_i32 : i32, i32
  }
}

</mosaic_0001>

<llo_original>
// kernel: point_mlp_1frame.1
$region0: #{point_mlp_1frame.1}
  #allocation0 [shape = 'u32[]', space=smem, size = 0x4, offset = 0x4, fixed_abs, tag = 'smem constant byte address 0x4 - core index']
  #allocation1 [shape = 'u32[144,128]{1,0:T(1,128)}', space=vmem, size = 0x12000, scoped, tag = 'internal scratch']
  %s0 = inlined_call_operand.vmem [shape: f32[200,3], index: 0, kind: input, shape index: {}]
  %s1 = inlined_call_operand.vmem [shape: f32[3,128], index: 1, kind: input, shape index: {}]
  %s2 = inlined_call_operand.vmem [shape: f32[1,128], index: 2, kind: input, shape index: {}]
  %s3 = inlined_call_operand.vmem [shape: bf16[128,128], index: 3, kind: input, shape index: {}]
  %s4 = inlined_call_operand.vmem [shape: f32[1,128], index: 4, kind: input, shape index: {}]
  %s5 = inlined_call_operand.vmem [shape: bf16[128,128], index: 5, kind: input, shape index: {}]
  %s6 = inlined_call_operand.vmem [shape: f32[1,128], index: 6, kind: input, shape index: {}]
  %s7 = inlined_call_operand.vmem [shape: bf16[128,128], index: 7, kind: input, shape index: {}]
  %s8 = inlined_call_operand.vmem [shape: f32[1,128], index: 8, kind: input, shape index: {}]
  %s9 = inlined_call_operand.vmem [shape: f32[200,3], index: 9, kind: output, shape index: {}]
  %s10 = sld [smem:[#allocation0]]
  $region46: #{point_mlp_1frame.1} parent=0
    _
  %s12 = ssub.s32 1, %s10
  %s13 = scalar_select 0, %s12, %s10
  // Predicated region
  $region2: #{point_mlp_1frame.1} parent=0 // pred_check
    _
  $region3: #{point_mlp_1frame.1} parent=0 // pred_check_branch
    %15 = sbr.rel (0) target = $region5
  $region4: #{point_mlp_1frame.1} parent=0 // pred_region
    _
  $region5: #{point_mlp_1frame.1} parent=0 // pred_fallthru
    _
  // Predicated region
  $region6: #{point_mlp_1frame.1} parent=0 // pred_check
    _
  $region7: #{point_mlp_1frame.1} parent=0 // pred_check_branch
    %17 = sbr.rel (0) target = $region9
  $region8: #{point_mlp_1frame.1} parent=0 // pred_region
    _
  $region9: #{point_mlp_1frame.1} parent=0 // pred_fallthru
    _
  // Predicated region
  $region10: #{point_mlp_1frame.1} parent=0 // pred_check
    _
  $region11: #{point_mlp_1frame.1} parent=0 // pred_check_branch
    %19 = sbr.rel (0) target = $region13
  $region12: #{point_mlp_1frame.1} parent=0 // pred_region
    _
  $region13: #{point_mlp_1frame.1} parent=0 // pred_fallthru
    _
  // Predicated region
  $region14: #{point_mlp_1frame.1} parent=0 // pred_check
    _
  $region15: #{point_mlp_1frame.1} parent=0 // pred_check_branch
    %21 = sbr.rel (0) target = $region17
  $region16: #{point_mlp_1frame.1} parent=0 // pred_region
    _
  $region17: #{point_mlp_1frame.1} parent=0 // pred_fallthru
    _
  // Predicated region
  $region18: #{point_mlp_1frame.1} parent=0 // pred_check
    _
  $region19: #{point_mlp_1frame.1} parent=0 // pred_check_branch
    %23 = sbr.rel (0) target = $region21
  $region20: #{point_mlp_1frame.1} parent=0 // pred_region
    _
  $region21: #{point_mlp_1frame.1} parent=0 // pred_fallthru
    _
  // Predicated region
  $region22: #{point_mlp_1frame.1} parent=0 // pred_check
    _
  $region23: #{point_mlp_1frame.1} parent=0 // pred_check_branch
    %25 = sbr.rel (0) target = $region25
  $region24: #{point_mlp_1frame.1} parent=0 // pred_region
    _
  $region25: #{point_mlp_1frame.1} parent=0 // pred_fallthru
    _
  // Predicated region
  $region26: #{point_mlp_1frame.1} parent=0 // pred_check
    _
  $region27: #{point_mlp_1frame.1} parent=0 // pred_check_branch
    %27 = sbr.rel (0) target = $region29
  $region28: #{point_mlp_1frame.1} parent=0 // pred_region
    _
  $region29: #{point_mlp_1frame.1} parent=0 // pred_fallthru
    _
  // Predicated region
  $region30: #{point_mlp_1frame.1} parent=0 // pred_check
    _
  $region31: #{point_mlp_1frame.1} parent=0 // pred_check_branch
    %29 = sbr.rel (0) target = $region33
  $region32: #{point_mlp_1frame.1} parent=0 // pred_region
    _
  $region33: #{point_mlp_1frame.1} parent=0 // pred_fallthru
    _
  // Predicated region
  $region34: #{point_mlp_1frame.1} parent=0 // pred_check
    _
  $region35: #{point_mlp_1frame.1} parent=0 // pred_check_branch
    %31 = sbr.rel (0) target = $region37
  $region36: #{point_mlp_1frame.1} parent=0 // pred_region
    _
  $region37: #{point_mlp_1frame.1} parent=0 // pred_fallthru
    _
  %v33 = vld [vmem:[%s0] sm:$0xff]
  %v34 = vld [vmem:[%s0 + $0x8] sm:$0xff]
  %v35 = vld [vmem:[%s0 + $0x10] sm:$0xff]
  %v36 = vld [vmem:[%s0 + $0x18] sm:$0xff]
  %v37 = vld [vmem:[%s0 + $0x20] sm:$0xff]
  %v38 = vld [vmem:[%s0 + $0x28] sm:$0xff]
  %v39 = vld [vmem:[%s0 + $0x30] sm:$0xff]
  %v40 = vld [vmem:[%s0 + $0x38] sm:$0xff]
  %v41 = vld [vmem:[%s0 + $0x40] sm:$0xff]
  %v42 = vld [vmem:[%s0 + $0x48] sm:$0xff]
  %v43 = vld [vmem:[%s0 + $0x50] sm:$0xff]
  %v44 = vld [vmem:[%s0 + $0x58] sm:$0xff]
  %v45 = vld [vmem:[%s0 + $0x60] sm:$0xff]
  %v46 = vld [vmem:[%s0 + $0x68] sm:$0xff]
  %v47 = vld [vmem:[%s0 + $0x70] sm:$0xff]
  %v48 = vld [vmem:[%s0 + $0x78] sm:$0xff]
  %v49 = vld [vmem:[%s0 + $0x80] sm:$0xff]
  %v50 = vld [vmem:[%s0 + $0x88] sm:$0xff]
  %v51 = vld [vmem:[%s0 + $0x90] sm:$0xff]
  %v52 = vld [vmem:[%s0 + $0x98] sm:$0xff]
  %v53 = vld [vmem:[%s0 + $0xa0] sm:$0xff]
  %v54 = vld [vmem:[%s0 + $0xa8] sm:$0xff]
  %v55 = vld [vmem:[%s0 + $0xb0] sm:$0xff]
  %v56 = vld [vmem:[%s0 + $0xb8] sm:$0xff]
  %v57 = vld [vmem:[%s0 + $0xc0] sm:$0xff]
  %v58 = vld [vmem:[%s1] sm:$0x7]
  %60 = vset.pattern.permute.xlu0 0
  %61 = vperm.xlu0 %60, %v33
  %v62 = vpop.permute.xlu0 %61
  %65 = vset.pattern.permute.xlu0 0
  %66 = vperm.xlu0 %65, %v34
  %v67 = vpop.permute.xlu0 %66
  %70 = vset.pattern.permute.xlu0 0
  %71 = vperm.xlu0 %70, %v35
  %v72 = vpop.permute.xlu0 %71
  %75 = vset.pattern.permute.xlu0 0
  %76 = vperm.xlu0 %75, %v36
  %v77 = vpop.permute.xlu0 %76
  %80 = vset.pattern.permute.xlu0 0
  %81 = vperm.xlu0 %80, %v37
  %v82 = vpop.permute.xlu0 %81
  %85 = vset.pattern.permute.xlu0 0
  %86 = vperm.xlu0 %85, %v38
  %v87 = vpop.permute.xlu0 %86
  %90 = vset.pattern.permute.xlu0 0
  %91 = vperm.xlu0 %90, %v39
  %v92 = vpop.permute.xlu0 %91
  %95 = vset.pattern.permute.xlu0 0
  %96 = vperm.xlu0 %95, %v40
  %v97 = vpop.permute.xlu0 %96
  %100 = vset.pattern.permute.xlu0 0
  %101 = vperm.xlu0 %100, %v41
  %v102 = vpop.permute.xlu0 %101
  %105 = vset.pattern.permute.xlu0 0
  %106 = vperm.xlu0 %105, %v42
  %v107 = vpop.permute.xlu0 %106
  %110 = vset.pattern.permute.xlu0 0
  %111 = vperm.xlu0 %110, %v43
  %v112 = vpop.permute.xlu0 %111
  %115 = vset.pattern.permute.xlu0 0
  %116 = vperm.xlu0 %115, %v44
  %v117 = vpop.permute.xlu0 %116
  %120 = vset.pattern.permute.xlu0 0
  %121 = vperm.xlu0 %120, %v45
  %v122 = vpop.permute.xlu0 %121
  %125 = vset.pattern.permute.xlu0 0
  %126 = vperm.xlu0 %125, %v46
  %v127 = vpop.permute.xlu0 %126
  %130 = vset.pattern.permute.xlu0 0
  %131 = vperm.xlu0 %130, %v47
  %v132 = vpop.permute.xlu0 %131
  %135 = vset.pattern.permute.xlu0 0
  %136 = vperm.xlu0 %135, %v48
  %v137 = vpop.permute.xlu0 %136
  %140 = vset.pattern.permute.xlu0 0
  %141 = vperm.xlu0 %140, %v49
  %v142 = vpop.permute.xlu0 %141
  %145 = vset.pattern.permute.xlu0 0
  %146 = vperm.xlu0 %145, %v50
  %v147 = vpop.permute.xlu0 %146
  %150 = vset.pattern.permute.xlu0 0
  %151 = vperm.xlu0 %150, %v51
  %v152 = vpop.permute.xlu0 %151
  %155 = vset.pattern.permute.xlu0 0
  %156 = vperm.xlu0 %155, %v52
  %v157 = vpop.permute.xlu0 %156
  %160 = vset.pattern.permute.xlu0 0
  %161 = vperm.xlu0 %160, %v53
  %v162 = vpop.permute.xlu0 %161
  %165 = vset.pattern.permute.xlu0 0
  %166 = vperm.xlu0 %165, %v54
  %v167 = vpop.permute.xlu0 %166
  %170 = vset.pattern.permute.xlu0 0
  %171 = vperm.xlu0 %170, %v55
  %v172 = vpop.permute.xlu0 %171
  %175 = vset.pattern.permute.xlu0 0
  %176 = vperm.xlu0 %175, %v56
  %v177 = vpop.permute.xlu0 %176
  %180 = vset.pattern.permute.xlu0 0
  %181 = vperm.xlu0 %180, %v57
  %v182 = vpop.permute.xlu0 %181
  %v184 = vlaneseq
  %v185 = vshrl.u32 %v184, 7
  %v186 = vsub.s32 0, %v185
  %v187 = vrot.slane %v58, %v186
  %v188 = vmul.f32 %v62, %v187
  %v189 = vmul.f32 %v67, %v187
  %v190 = vmul.f32 %v72, %v187
  %v191 = vmul.f32 %v77, %v187
  %v192 = vmul.f32 %v82, %v187
  %v193 = vmul.f32 %v87, %v187
  %v194 = vmul.f32 %v92, %v187
  %v195 = vmul.f32 %v97, %v187
  %v196 = vmul.f32 %v102, %v187
  %v197 = vmul.f32 %v107, %v187
  %v198 = vmul.f32 %v112, %v187
  %v199 = vmul.f32 %v117, %v187
  %v200 = vmul.f32 %v122, %v187
  %v201 = vmul.f32 %v127, %v187
  %v202 = vmul.f32 %v132, %v187
  %v203 = vmul.f32 %v137, %v187
  %v204 = vmul.f32 %v142, %v187
  %v205 = vmul.f32 %v147, %v187
  %v206 = vmul.f32 %v152, %v187
  %v207 = vmul.f32 %v157, %v187
  %v208 = vmul.f32 %v162, %v187
  %v209 = vmul.f32 %v167, %v187
  %v210 = vmul.f32 %v172, %v187
  %v211 = vmul.f32 %v177, %v187
  %v212 = vmul.f32 %v182, %v187
  %213 = vset.pattern.permute.xlu0 1
  %214 = vperm.xlu0 %213, %v33
  %v215 = vpop.permute.xlu0 %214
  %217 = vset.pattern.permute.xlu0 1
  %218 = vperm.xlu0 %217, %v34
  %v219 = vpop.permute.xlu0 %218
  %221 = vset.pattern.permute.xlu0 1
  %222 = vperm.xlu0 %221, %v35
  %v223 = vpop.permute.xlu0 %222
  %225 = vset.pattern.permute.xlu0 1
  %226 = vperm.xlu0 %225, %v36
  %v227 = vpop.permute.xlu0 %226
  %229 = vset.pattern.permute.xlu0 1
  %230 = vperm.xlu0 %229, %v37
  %v231 = vpop.permute.xlu0 %230
  %233 = vset.pattern.permute.xlu0 1
  %234 = vperm.xlu0 %233, %v38
  %v235 = vpop.permute.xlu0 %234
  %237 = vset.pattern.permute.xlu0 1
  %238 = vperm.xlu0 %237, %v39
  %v239 = vpop.permute.xlu0 %238
  %241 = vset.pattern.permute.xlu0 1
  %242 = vperm.xlu0 %241, %v40
  %v243 = vpop.permute.xlu0 %242
  %245 = vset.pattern.permute.xlu0 1
  %246 = vperm.xlu0 %245, %v41
  %v247 = vpop.permute.xlu0 %246
  %249 = vset.pattern.permute.xlu0 1
  %250 = vperm.xlu0 %249, %v42
  %v251 = vpop.permute.xlu0 %250
  %253 = vset.pattern.permute.xlu0 1
  %254 = vperm.xlu0 %253, %v43
  %v255 = vpop.permute.xlu0 %254
  %257 = vset.pattern.permute.xlu0 1
  %258 = vperm.xlu0 %257, %v44
  %v259 = vpop.permute.xlu0 %258
  %261 = vset.pattern.permute.xlu0 1
  %262 = vperm.xlu0 %261, %v45
  %v263 = vpop.permute.xlu0 %262
  %265 = vset.pattern.permute.xlu0 1
  %266 = vperm.xlu0 %265, %v46
  %v267 = vpop.permute.xlu0 %266
  %269 = vset.pattern.permute.xlu0 1
  %270 = vperm.xlu0 %269, %v47
  %v271 = vpop.permute.xlu0 %270
  %273 = vset.pattern.permute.xlu0 1
  %274 = vperm.xlu0 %273, %v48
  %v275 = vpop.permute.xlu0 %274
  %277 = vset.pattern.permute.xlu0 1
  %278 = vperm.xlu0 %277, %v49
  %v279 = vpop.permute.xlu0 %278
  %281 = vset.pattern.permute.xlu0 1
  %282 = vperm.xlu0 %281, %v50
  %v283 = vpop.permute.xlu0 %282
  %285 = vset.pattern.permute.xlu0 1
  %286 = vperm.xlu0 %285, %v51
  %v287 = vpop.permute.xlu0 %286
  %289 = vset.pattern.permute.xlu0 1
  %290 = vperm.xlu0 %289, %v52
  %v291 = vpop.permute.xlu0 %290
  %293 = vset.pattern.permute.xlu0 1
  %294 = vperm.xlu0 %293, %v53
  %v295 = vpop.permute.xlu0 %294
  %297 = vset.pattern.permute.xlu0 1
  %298 = vperm.xlu0 %297, %v54
  %v299 = vpop.permute.xlu0 %298
  %301 = vset.pattern.permute.xlu0 1
  %302 = vperm.xlu0 %301, %v55
  %v303 = vpop.permute.xlu0 %302
  %305 = vset.pattern.permute.xlu0 1
  %306 = vperm.xlu0 %305, %v56
  %v307 = vpop.permute.xlu0 %306
  %309 = vset.pattern.permute.xlu0 1
  %310 = vperm.xlu0 %309, %v57
  %v311 = vpop.permute.xlu0 %310
  %v313 = vlaneseq
  %v314 = vshrl.u32 %v313, 7
  %v315 = vsub.s32 1, %v314
  %v316 = vrot.slane %v58, %v315
  %v317 = vmul.f32 %v215, %v316
  %v318 = vmul.f32 %v219, %v316
  %v319 = vmul.f32 %v223, %v316
  %v320 = vmul.f32 %v227, %v316
  %v321 = vmul.f32 %v231, %v316
  %v322 = vmul.f32 %v235, %v316
  %v323 = vmul.f32 %v239, %v316
  %v324 = vmul.f32 %v243, %v316
  %v325 = vmul.f32 %v247, %v316
  %v326 = vmul.f32 %v251, %v316
  %v327 = vmul.f32 %v255, %v316
  %v328 = vmul.f32 %v259, %v316
  %v329 = vmul.f32 %v263, %v316
  %v330 = vmul.f32 %v267, %v316
  %v331 = vmul.f32 %v271, %v316
  %v332 = vmul.f32 %v275, %v316
  %v333 = vmul.f32 %v279, %v316
  %v334 = vmul.f32 %v283, %v316
  %v335 = vmul.f32 %v287, %v316
  %v336 = vmul.f32 %v291, %v316
  %v337 = vmul.f32 %v295, %v316
  %v338 = vmul.f32 %v299, %v316
  %v339 = vmul.f32 %v303, %v316
  %v340 = vmul.f32 %v307, %v316
  %v341 = vmul.f32 %v311, %v316
  %v342 = vadd.f32 %v188, %v317
  %v343 = vadd.f32 %v189, %v318
  %v344 = vadd.f32 %v190, %v319
  %v345 = vadd.f32 %v191, %v320
  %v346 = vadd.f32 %v192, %v321
  %v347 = vadd.f32 %v193, %v322
  %v348 = vadd.f32 %v194, %v323
  %v349 = vadd.f32 %v195, %v324
  %v350 = vadd.f32 %v196, %v325
  %v351 = vadd.f32 %v197, %v326
  %v352 = vadd.f32 %v198, %v327
  %v353 = vadd.f32 %v199, %v328
  %v354 = vadd.f32 %v200, %v329
  %v355 = vadd.f32 %v201, %v330
  %v356 = vadd.f32 %v202, %v331
  %v357 = vadd.f32 %v203, %v332
  %v358 = vadd.f32 %v204, %v333
  %v359 = vadd.f32 %v205, %v334
  %v360 = vadd.f32 %v206, %v335
  %v361 = vadd.f32 %v207, %v336
  %v362 = vadd.f32 %v208, %v337
  %v363 = vadd.f32 %v209, %v338
  %v364 = vadd.f32 %v210, %v339
  %v365 = vadd.f32 %v211, %v340
  %v366 = vadd.f32 %v212, %v341
  %367 = vset.pattern.permute.xlu0 2
  %368 = vperm.xlu0 %367, %v33
  %v369 = vpop.permute.xlu0 %368
  %371 = vset.pattern.permute.xlu0 2
  %372 = vperm.xlu0 %371, %v34
  %v373 = vpop.permute.xlu0 %372
  %375 = vset.pattern.permute.xlu0 2
  %376 = vperm.xlu0 %375, %v35
  %v377 = vpop.permute.xlu0 %376
  %379 = vset.pattern.permute.xlu0 2
  %380 = vperm.xlu0 %379, %v36
  %v381 = vpop.permute.xlu0 %380
  %383 = vset.pattern.permute.xlu0 2
  %384 = vperm.xlu0 %383, %v37
  %v385 = vpop.permute.xlu0 %384
  %387 = vset.pattern.permute.xlu0 2
  %388 = vperm.xlu0 %387, %v38
  %v389 = vpop.permute.xlu0 %388
  %391 = vset.pattern.permute.xlu0 2
  %392 = vperm.xlu0 %391, %v39
  %v393 = vpop.permute.xlu0 %392
  %395 = vset.pattern.permute.xlu0 2
  %396 = vperm.xlu0 %395, %v40
  %v397 = vpop.permute.xlu0 %396
  %399 = vset.pattern.permute.xlu0 2
  %400 = vperm.xlu0 %399, %v41
  %v401 = vpop.permute.xlu0 %400
  %403 = vset.pattern.permute.xlu0 2
  %404 = vperm.xlu0 %403, %v42
  %v405 = vpop.permute.xlu0 %404
  %407 = vset.pattern.permute.xlu0 2
  %408 = vperm.xlu0 %407, %v43
  %v409 = vpop.permute.xlu0 %408
  %411 = vset.pattern.permute.xlu0 2
  %412 = vperm.xlu0 %411, %v44
  %v413 = vpop.permute.xlu0 %412
  %415 = vset.pattern.permute.xlu0 2
  %416 = vperm.xlu0 %415, %v45
  %v417 = vpop.permute.xlu0 %416
  %419 = vset.pattern.permute.xlu0 2
  %420 = vperm.xlu0 %419, %v46
  %v421 = vpop.permute.xlu0 %420
  %423 = vset.pattern.permute.xlu0 2
  %424 = vperm.xlu0 %423, %v47
  %v425 = vpop.permute.xlu0 %424
  %427 = vset.pattern.permute.xlu0 2
  %428 = vperm.xlu0 %427, %v48
  %v429 = vpop.permute.xlu0 %428
  %431 = vset.pattern.permute.xlu0 2
  %432 = vperm.xlu0 %431, %v49
  %v433 = vpop.permute.xlu0 %432
  %435 = vset.pattern.permute.xlu0 2
  %436 = vperm.xlu0 %435, %v50
  %v437 = vpop.permute.xlu0 %436
  %439 = vset.pattern.permute.xlu0 2
  %440 = vperm.xlu0 %439, %v51
  %v441 = vpop.permute.xlu0 %440
  %443 = vset.pattern.permute.xlu0 2
  %444 = vperm.xlu0 %443, %v52
  %v445 = vpop.permute.xlu0 %444
  %447 = vset.pattern.permute.xlu0 2
  %448 = vperm.xlu0 %447, %v53
  %v449 = vpop.permute.xlu0 %448
  %451 = vset.pattern.permute.xlu0 2
  %452 = vperm.xlu0 %451, %v54
  %v453 = vpop.permute.xlu0 %452
  %455 = vset.pattern.permute.xlu0 2
  %456 = vperm.xlu0 %455, %v55
  %v457 = vpop.permute.xlu0 %456
  %459 = vset.pattern.permute.xlu0 2
  %460 = vperm.xlu0 %459, %v56
  %v461 = vpop.permute.xlu0 %460
  %463 = vset.pattern.permute.xlu0 2
  %464 = vperm.xlu0 %463, %v57
  %v465 = vpop.permute.xlu0 %464
  %v467 = vlaneseq
  %v468 = vshrl.u32 %v467, 7
  %v469 = vsub.s32 2, %v468
  %v470 = vrot.slane %v58, %v469
  %v471 = vmul.f32 %v369, %v470
  %v472 = vmul.f32 %v373, %v470
  %v473 = vmul.f32 %v377, %v470
  %v474 = vmul.f32 %v381, %v470
  %v475 = vmul.f32 %v385, %v470
  %v476 = vmul.f32 %v389, %v470
  %v477 = vmul.f32 %v393, %v470
  %v478 = vmul.f32 %v397, %v470
  %v479 = vmul.f32 %v401, %v470
  %v480 = vmul.f32 %v405, %v470
  %v481 = vmul.f32 %v409, %v470
  %v482 = vmul.f32 %v413, %v470
  %v483 = vmul.f32 %v417, %v470
  %v484 = vmul.f32 %v421, %v470
  %v485 = vmul.f32 %v425, %v470
  %v486 = vmul.f32 %v429, %v470
  %v487 = vmul.f32 %v433, %v470
  %v488 = vmul.f32 %v437, %v470
  %v489 = vmul.f32 %v441, %v470
  %v490 = vmul.f32 %v445, %v470
  %v491 = vmul.f32 %v449, %v470
  %v492 = vmul.f32 %v453, %v470
  %v493 = vmul.f32 %v457, %v470
  %v494 = vmul.f32 %v461, %v470
  %v495 = vmul.f32 %v465, %v470
  %v496 = vadd.f32 %v342, %v471
  %v497 = vadd.f32 %v343, %v472
  %v498 = vadd.f32 %v344, %v473
  %v499 = vadd.f32 %v345, %v474
  %v500 = vadd.f32 %v346, %v475
  %v501 = vadd.f32 %v347, %v476
  %v502 = vadd.f32 %v348, %v477
  %v503 = vadd.f32 %v349, %v478
  %v504 = vadd.f32 %v350, %v479
  %v505 = vadd.f32 %v351, %v480
  %v506 = vadd.f32 %v352, %v481
  %v507 = vadd.f32 %v353, %v482
  %v508 = vadd.f32 %v354, %v483
  %v509 = vadd.f32 %v355, %v484
  %v510 = vadd.f32 %v356, %v485
  %v511 = vadd.f32 %v357, %v486
  %v512 = vadd.f32 %v358, %v487
  %v513 = vadd.f32 %v359, %v488
  %v514 = vadd.f32 %v360, %v489
  %v515 = vadd.f32 %v361, %v490
  %v516 = vadd.f32 %v362, %v491
  %v517 = vadd.f32 %v363, %v492
  %v518 = vadd.f32 %v364, %v493
  %v519 = vadd.f32 %v365, %v494
  %v520 = vadd.f32 %v366, %v495
  %v521 = vld [vmem:[%s2] sm:$0x1]
  %v523 = vlaneseq
  %v524 = vshrl.u32 %v523, 7
  %v525 = vsub.s32 0, %v524
  %v526 = vrot.slane %v521, %v525
  %v528 = vadd.f32 %v496, %v526
  %v529 = vadd.f32 %v497, %v526
  %v530 = vadd.f32 %v498, %v526
  %v531 = vadd.f32 %v499, %v526
  %v532 = vadd.f32 %v500, %v526
  %v533 = vadd.f32 %v501, %v526
  %v534 = vadd.f32 %v502, %v526
  %v535 = vadd.f32 %v503, %v526
  %v536 = vadd.f32 %v504, %v526
  %v537 = vadd.f32 %v505, %v526
  %v538 = vadd.f32 %v506, %v526
  %v539 = vadd.f32 %v507, %v526
  %v540 = vadd.f32 %v508, %v526
  %v541 = vadd.f32 %v509, %v526
  %v542 = vadd.f32 %v510, %v526
  %v543 = vadd.f32 %v511, %v526
  %v544 = vadd.f32 %v512, %v526
  %v545 = vadd.f32 %v513, %v526
  %v546 = vadd.f32 %v514, %v526
  %v547 = vadd.f32 %v515, %v526
  %v548 = vadd.f32 %v516, %v526
  %v549 = vadd.f32 %v517, %v526
  %v550 = vadd.f32 %v518, %v526
  %v551 = vadd.f32 %v519, %v526
  %v552 = vadd.f32 %v520, %v526
  %v553 = vmax.f32 %v528, 0.0
  %v554 = vmax.f32 %v529, 0.0
  %v555 = vmax.f32 %v530, 0.0
  %v556 = vmax.f32 %v531, 0.0
  %v557 = vmax.f32 %v532, 0.0
  %v558 = vmax.f32 %v533, 0.0
  %v559 = vmax.f32 %v534, 0.0
  %v560 = vmax.f32 %v535, 0.0
  %v561 = vmax.f32 %v536, 0.0
  %v562 = vmax.f32 %v537, 0.0
  %v563 = vmax.f32 %v538, 0.0
  %v564 = vmax.f32 %v539, 0.0
  %v565 = vmax.f32 %v540, 0.0
  %v566 = vmax.f32 %v541, 0.0
  %v567 = vmax.f32 %v542, 0.0
  %v568 = vmax.f32 %v543, 0.0
  %v569 = vmax.f32 %v544, 0.0
  %v570 = vmax.f32 %v545, 0.0
  %v571 = vmax.f32 %v546, 0.0
  %v572 = vmax.f32 %v547, 0.0
  %v573 = vmax.f32 %v548, 0.0
  %v574 = vmax.f32 %v549, 0.0
  %v575 = vmax.f32 %v550, 0.0
  %v576 = vmax.f32 %v551, 0.0
  %v577 = vmax.f32 %v552, 0.0
  %v578 = vpack.c.bf16 %v554, %v553
  %v579 = vpack.c.bf16 %v556, %v555
  %v580 = vpack.c.bf16 %v558, %v557
  %v581 = vpack.c.bf16 %v560, %v559
  %v582 = vpack.c.bf16 %v562, %v561
  %v583 = vpack.c.bf16 %v564, %v563
  %v584 = vpack.c.bf16 %v566, %v565
  %v585 = vpack.c.bf16 %v568, %v567
  %v586 = vpack.c.bf16 %v570, %v569
  %v587 = vpack.c.bf16 %v572, %v571
  %v588 = vpack.c.bf16 %v574, %v573
  %v589 = vpack.c.bf16 %v576, %v575
  %v590 = vpack.c.bf16 %v577, %v577
  %v591 = vld [vmem:[%s3] sm:$0xf]
  %v592 = vld [vmem:[%s3 + $0x4] sm:$0xf]
  %v593 = vld [vmem:[%s3 + $0x8] sm:$0xf]
  %v594 = vld [vmem:[%s3 + $0xc] sm:$0xf]
  %v595 = vld [vmem:[%s3 + $0x10] sm:$0xf]
  %v596 = vld [vmem:[%s3 + $0x14] sm:$0xf]
  %v597 = vld [vmem:[%s3 + $0x18] sm:$0xf]
  %v598 = vld [vmem:[%s3 + $0x1c] sm:$0xf]
  %v599 = vld [vmem:[%s3 + $0x20] sm:$0xf]
  %v600 = vld [vmem:[%s3 + $0x24] sm:$0xf]
  %v601 = vld [vmem:[%s3 + $0x28] sm:$0xf]
  %v602 = vld [vmem:[%s3 + $0x2c] sm:$0xf]
  %v603 = vld [vmem:[%s3 + $0x30] sm:$0xf]
  %v604 = vld [vmem:[%s3 + $0x34] sm:$0xf]
  %v605 = vld [vmem:[%s3 + $0x38] sm:$0xf]
  %v606 = vld [vmem:[%s3 + $0x3c] sm:$0xf]
  %v607 = vld [vmem:[%s4] sm:$0x1]
  %v609 = vlaneseq
  %v610 = vshrl.u32 %v609, 7
  %v611 = vsub.s32 0, %v610
  %v612 = vrot.slane %v607, %v611
  %v630 = vunpack.c.l.b16 %v591
  %v631 = vunpack.c.l.b16 %v592
  %v632 = vunpack.c.l.b16 %v593
  %v633 = vunpack.c.l.b16 %v594
  %v634 = vunpack.c.l.b16 %v595
  %v635 = vunpack.c.l.b16 %v596
  %v636 = vunpack.c.l.b16 %v597
  %v637 = vunpack.c.l.b16 %v598
  %v638 = vunpack.c.l.b16 %v599
  %v639 = vunpack.c.l.b16 %v600
  %v640 = vunpack.c.l.b16 %v601
  %v641 = vunpack.c.l.b16 %v602
  %v642 = vunpack.c.l.b16 %v603
  %v643 = vunpack.c.l.b16 %v604
  %v644 = vunpack.c.l.b16 %v605
  %v645 = vunpack.c.l.b16 %v606
  %v646 = vpack.c.b16 %v631, %v630
  %v647 = vpack.c.b16 %v633, %v632
  %v648 = vpack.c.b16 %v635, %v634
  %v649 = vpack.c.b16 %v637, %v636
  %v650 = vpack.c.b16 %v639, %v638
  %v651 = vpack.c.b16 %v641, %v640
  %v652 = vpack.c.b16 %v643, %v642
  %v653 = vpack.c.b16 %v645, %v644
  %662 = vmatprep.subr.bf16.mxu0 0
  %663 = vmatpush1.bf16.msra.mxu0 %v646
  %664 = vmatprep.subr.bf16.mxu0 0
  %665 = vmatpush1.bf16.msra.mxu0 %v647
  %666 = vmatprep.subr.bf16.mxu0 0
  %667 = vmatpush1.bf16.msra.mxu0 %v648
  %668 = vmatprep.subr.bf16.mxu0 0
  %669 = vmatpush1.bf16.msra.mxu0 %v649
  %670 = vmatprep.subr.bf16.mxu0 0
  %671 = vmatpush1.bf16.msra.mxu0 %v650
  %672 = vmatprep.subr.bf16.mxu0 0
  %673 = vmatpush1.bf16.msra.mxu0 %v651
  %674 = vmatprep.subr.bf16.mxu0 0
  %675 = vmatpush1.bf16.msra.mxu0 %v652
  %676 = vmatprep.subr.bf16.mxu0 0
  %677 = vmatpush1.bf16.msra.mxu0 %v653
  %678 = vmatprep.subr.bf16.mxu0 0
  %679 = vmatpush1.bf16.msra.mxu0 0
  %680 = vmatprep.subr.bf16.mxu0 0
  %681 = vmatpush1.bf16.msra.mxu0 0
  %682 = vmatprep.subr.bf16.mxu0 0
  %683 = vmatpush1.bf16.msra.mxu0 0
  %684 = vmatprep.subr.bf16.mxu0 0
  %685 = vmatpush1.bf16.msra.mxu0 0
  %686 = vmatprep.subr.bf16.mxu0 0
  %687 = vmatpush1.bf16.msra.mxu0 0
  %688 = vmatprep.subr.bf16.mxu0 0
  %689 = vmatpush1.bf16.msra.mxu0 0
  %690 = vmatprep.subr.bf16.mxu0 0
  %691 = vmatpush1.bf16.msra.mxu0 0
  %692 = vmatprep.subr.bf16.mxu0 0
  %693 = vmatpush1.bf16.msra.mxu0 0
  %694 = vmatprep.mubr.bf16.mxu0 0
  %695 = vmatmul.mubr.bf16.gmra.mrb[0].mxu0 %v578
  %v696 = vpop.f32.mrb[0].mxu0
  %v697 = vadd.f32 %v612, %v696
  %v698 = vpop.f32.mrb[0].mxu0
  %v699 = vpop.f32.mrb[0].mxu0
  %v700 = vadd.f32 %v612, %v699
  %v701 = vpop.f32.mrb[0].mxu0
  %702 = vmatprep.mubr.bf16.mxu0 0
  %703 = vmatmul.mubr.bf16.gmra.mrb[0].mxu0 %v579
  %v704 = vpop.f32.mrb[0].mxu0
  %v705 = vadd.f32 %v612, %v704
  %v706 = vpop.f32.mrb[0].mxu0
  %v707 = vpop.f32.mrb[0].mxu0
  %v708 = vadd.f32 %v612, %v707
  %v709 = vpop.f32.mrb[0].mxu0
  %710 = vmatprep.mubr.bf16.mxu0 0
  %711 = vmatmul.mubr.bf16.gmra.mrb[0].mxu0 %v580
  %v712 = vpop.f32.mrb[0].mxu0
  %v713 = vadd.f32 %v612, %v712
  %v714 = vpop.f32.mrb[0].mxu0
  %v715 = vpop.f32.mrb[0].mxu0
  %v716 = vadd.f32 %v612, %v715
  %v717 = vpop.f32.mrb[0].mxu0
  %718 = vmatprep.mubr.bf16.mxu0 0
  %719 = vmatmul.mubr.bf16.gmra.mrb[0].mxu0 %v581
  %v720 = vpop.f32.mrb[0].mxu0
  %v721 = vadd.f32 %v612, %v720
  %v722 = vpop.f32.mrb[0].mxu0
  %v723 = vpop.f32.mrb[0].mxu0
  %v724 = vadd.f32 %v612, %v723
  %v725 = vpop.f32.mrb[0].mxu0
  %726 = vmatprep.mubr.bf16.mxu0 0
  %727 = vmatmul.mubr.bf16.gmra.mrb[0].mxu0 %v582
  %v728 = vpop.f32.mrb[0].mxu0
  %v729 = vadd.f32 %v612, %v728
  %v730 = vpop.f32.mrb[0].mxu0
  %v731 = vpop.f32.mrb[0].mxu0
  %v732 = vadd.f32 %v612, %v731
  %v733 = vpop.f32.mrb[0].mxu0
  %734 = vmatprep.mubr.bf16.mxu0 0
  %735 = vmatmul.mubr.bf16.gmra.mrb[0].mxu0 %v583
  %v736 = vpop.f32.mrb[0].mxu0
  %v737 = vadd.f32 %v612, %v736
  %v738 = vpop.f32.mrb[0].mxu0
  %v739 = vpop.f32.mrb[0].mxu0
  %v740 = vadd.f32 %v612, %v739
  %v741 = vpop.f32.mrb[0].mxu0
  %742 = vmatprep.mubr.bf16.mxu0 0
  %743 = vmatmul.mubr.bf16.gmra.mrb[0].mxu0 %v584
  %v744 = vpop.f32.mrb[0].mxu0
  %v745 = vadd.f32 %v612, %v744
  %v746 = vpop.f32.mrb[0].mxu0
  %v747 = vpop.f32.mrb[0].mxu0
  %v748 = vadd.f32 %v612, %v747
  %v749 = vpop.f32.mrb[0].mxu0
  %750 = vmatprep.mubr.bf16.mxu0 0
  %751 = vmatmul.mubr.bf16.gmra.mrb[0].mxu0 %v585
  %v752 = vpop.f32.mrb[0].mxu0
  %v753 = vadd.f32 %v612, %v752
  %v754 = vpop.f32.mrb[0].mxu0
  %v755 = vpop.f32.mrb[0].mxu0
  %v756 = vadd.f32 %v612, %v755
  %v757 = vpop.f32.mrb[0].mxu0
  %758 = vmatprep.mubr.bf16.mxu0 0
  %759 = vmatmul.mubr.bf16.gmra.mrb[0].mxu0 %v586
  %v760 = vpop.f32.mrb[0].mxu0
  %v761 = vadd.f32 %v612, %v760
  %v762 = vpop.f32.mrb[0].mxu0
  %v763 = vpop.f32.mrb[0].mxu0
  %v764 = vadd.f32 %v612, %v763
  %v765 = vpop.f32.mrb[0].mxu0
  %766 = vmatprep.mubr.bf16.mxu0 0
  %767 = vmatmul.mubr.bf16.gmra.mrb[0].mxu0 %v587
  %v768 = vpop.f32.mrb[0].mxu0
  %v769 = vadd.f32 %v612, %v768
  %v770 = vpop.f32.mrb[0].mxu0
  %v771 = vpop.f32.mrb[0].mxu0
  %v772 = vadd.f32 %v612, %v771
  %v773 = vpop.f32.mrb[0].mxu0
  %774 = vmatprep.mubr.bf16.mxu0 0
  %775 = vmatmul.mubr.bf16.gmra.mrb[0].mxu0 %v588
  %v776 = vpop.f32.mrb[0].mxu0
  %v777 = vadd.f32 %v612, %v776
  %v778 = vpop.f32.mrb[0].mxu0
  %v779 = vpop.f32.mrb[0].mxu0
  %v780 = vadd.f32 %v612, %v779
  %v781 = vpop.f32.mrb[0].mxu0
  %782 = vmatprep.mubr.bf16.mxu0 0
  %783 = vmatmul.mubr.bf16.gmra.mrb[0].mxu0 %v589
  %v784 = vpop.f32.mrb[0].mxu0
  %v785 = vadd.f32 %v612, %v784
  %v786 = vpop.f32.mrb[0].mxu0
  %v787 = vpop.f32.mrb[0].mxu0
  %v788 = vadd.f32 %v612, %v787
  %v789 = vpop.f32.mrb[0].mxu0
  %790 = vmatprep.mubr.bf16.mxu0 0
  %791 = vmatmul.mubr.bf16.gmra.mrb[0].mxu0 %v590
  %v792 = vpop.f32.mrb[0].mxu0
  %v793 = vadd.f32 %v612, %v792
  %v794 = vpop.f32.mrb[0].mxu0
  %v795 = vpop.f32.mrb[0].mxu0
  %v796 = vpop.f32.mrb[0].mxu0
  %797 = vdwg.mxu0
  %v798 = vmax.f32 %v697, 0.0
  %v799 = vmax.f32 %v700, 0.0
  %v800 = vmax.f32 %v705, 0.0
  %v801 = vmax.f32 %v708, 0.0
  %v802 = vmax.f32 %v713, 0.0
  %v803 = vmax.f32 %v716, 0.0
  %v804 = vmax.f32 %v721, 0.0
  %v805 = vmax.f32 %v724, 0.0
  %v806 = vmax.f32 %v729, 0.0
  %v807 = vmax.f32 %v732, 0.0
  %v808 = vmax.f32 %v737, 0.0
  %v809 = vmax.f32 %v740, 0.0
  %v810 = vmax.f32 %v745, 0.0
  %v811 = vmax.f32 %v748, 0.0
  %v812 = vmax.f32 %v753, 0.0
  %v813 = vmax.f32 %v756, 0.0
  %v814 = vmax.f32 %v761, 0.0
  %v815 = vmax.f32 %v764, 0.0
  %v816 = vmax.f32 %v769, 0.0
  %v817 = vmax.f32 %v772, 0.0
  %v818 = vmax.f32 %v777, 0.0
  %v819 = vmax.f32 %v780, 0.0
  %v820 = vmax.f32 %v785, 0.0
  %v821 = vmax.f32 %v788, 0.0
  %v822 = vmax.f32 %v793, 0.0
  %v823 = vpack.c.bf16 %v799, %v798
  %v824 = vpack.c.bf16 %v801, %v800
  %v825 = vpack.c.bf16 %v803, %v802
  %v826 = vpack.c.bf16 %v805, %v804
  %v827 = vpack.c.bf16 %v807, %v806
  %v828 = vpack.c.bf16 %v809, %v808
  %v829 = vpack.c.bf16 %v811, %v810
  %v830 = vpack.c.bf16 %v813, %v812
  %v831 = vpack.c.bf16 %v815, %v814
  %v832 = vpack.c.bf16 %v817, %v816
  %v833 = vpack.c.bf16 %v819, %v818
  %v834 = vpack.c.bf16 %v821, %v820
  %v835 = vpack.c.bf16 %v822, %v822
  %v836 = vld [vmem:[%s5] sm:$0xf]
  %v837 = vld [vmem:[%s5 + $0x4] sm:$0xf]
  %v838 = vld [vmem:[%s5 + $0x8] sm:$0xf]
  %v839 = vld [vmem:[%s5 + $0xc] sm:$0xf]
  %v840 = vld [vmem:[%s5 + $0x10] sm:$0xf]
  %v841 = vld [vmem:[%s5 + $0x14] sm:$0xf]
  %v842 = vld [vmem:[%s5 + $0x18] sm:$0xf]
  %v843 = vld [vmem:[%s5 + $0x1c] sm:$0xf]
  %v844 = vld [vmem:[%s5 + $0x20] sm:$0xf]
  %v845 = vld [vmem:[%s5 + $0x24] sm:$0xf]
  %v846 = vld [vmem:[%s5 + $0x28] sm:$0xf]
  %v847 = vld [vmem:[%s5 + $0x2c] sm:$0xf]
  %v848 = vld [vmem:[%s5 + $0x30] sm:$0xf]
  %v849 = vld [vmem:[%s5 + $0x34] sm:$0xf]
  %v850 = vld [vmem:[%s5 + $0x38] sm:$0xf]
  %v851 = vld [vmem:[%s5 + $0x3c] sm:$0xf]
  %v852 = vld [vmem:[%s6] sm:$0x1]
  %v854 = vlaneseq
  %v855 = vshrl.u32 %v854, 7
  %v856 = vsub.s32 0, %v855
  %v857 = vrot.slane %v852, %v856
  %v875 = vunpack.c.l.b16 %v836
  %v876 = vunpack.c.l.b16 %v837
  %v877 = vunpack.c.l.b16 %v838
  %v878 = vunpack.c.l.b16 %v839
  %v879 = vunpack.c.l.b16 %v840
  %v880 = vunpack.c.l.b16 %v841
  %v881 = vunpack.c.l.b16 %v842
  %v882 = vunpack.c.l.b16 %v843
  %v883 = vunpack.c.l.b16 %v844
  %v884 = vunpack.c.l.b16 %v845
  %v885 = vunpack.c.l.b16 %v846
  %v886 = vunpack.c.l.b16 %v847
  %v887 = vunpack.c.l.b16 %v848
  %v888 = vunpack.c.l.b16 %v849
  %v889 = vunpack.c.l.b16 %v850
  %v890 = vunpack.c.l.b16 %v851
  %v891 = vpack.c.b16 %v876, %v875
  %v892 = vpack.c.b16 %v878, %v877
  %v893 = vpack.c.b16 %v880, %v879
  %v894 = vpack.c.b16 %v882, %v881
  %v895 = vpack.c.b16 %v884, %v883
  %v896 = vpack.c.b16 %v886, %v885
  %v897 = vpack.c.b16 %v888, %v887
  %v898 = vpack.c.b16 %v890, %v889
  %907 = vmatprep.subr.bf16.mxu0 0
  %908 = vmatpush1.bf16.msra.mxu0 %v891
  %909 = vmatprep.subr.bf16.mxu0 0
  %910 = vmatpush1.bf16.msra.mxu0 %v892
  %911 = vmatprep.subr.bf16.mxu0 0
  %912 = vmatpush1.bf16.msra.mxu0 %v893
  %913 = vmatprep.subr.bf16.mxu0 0
  %914 = vmatpush1.bf16.msra.mxu0 %v894
  %915 = vmatprep.subr.bf16.mxu0 0
  %916 = vmatpush1.bf16.msra.mxu0 %v895
  %917 = vmatprep.subr.bf16.mxu0 0
  %918 = vmatpush1.bf16.msra.mxu0 %v896
  %919 = vmatprep.subr.bf16.mxu0 0
  %920 = vmatpush1.bf16.msra.mxu0 %v897
  %921 = vmatprep.subr.bf16.mxu0 0
  %922 = vmatpush1.bf16.msra.mxu0 %v898
  %923 = vmatprep.subr.bf16.mxu0 0
  %924 = vmatpush1.bf16.msra.mxu0 0
  %925 = vmatprep.subr.bf16.mxu0 0
  %926 = vmatpush1.bf16.msra.mxu0 0
  %927 = vmatprep.subr.bf16.mxu0 0
  %928 = vmatpush1.bf16.msra.mxu0 0
  %929 = vmatprep.subr.bf16.mxu0 0
  %930 = vmatpush1.bf16.msra.mxu0 0
  %931 = vmatprep.subr.bf16.mxu0 0
  %932 = vmatpush1.bf16.msra.mxu0 0
  %933 = vmatprep.subr.bf16.mxu0 0
  %934 = vmatpush1.bf16.msra.mxu0 0
  %935 = vmatprep.subr.bf16.mxu0 0
  %936 = vmatpush1.bf16.msra.mxu0 0
  %937 = vmatprep.subr.bf16.mxu0 0
  %938 = vmatpush1.bf16.msra.mxu0 0
  %939 = vmatprep.mubr.bf16.mxu0 0
  %940 = vmatmul.mubr.bf16.gmra.mrb[0].mxu0 %v823
  %v941 = vpop.f32.mrb[0].mxu0
  %v942 = vadd.f32 %v857, %v941
  %v943 = vpop.f32.mrb[0].mxu0
  %v944 = vpop.f32.mrb[0].mxu0
  %v945 = vadd.f32 %v857, %v944
  %v946 = vpop.f32.mrb[0].mxu0
  %947 = vmatprep.mubr.bf16.mxu0 0
  %948 = vmatmul.mubr.bf16.gmra.mrb[0].mxu0 %v824
  %v949 = vpop.f32.mrb[0].mxu0
  %v950 = vadd.f32 %v857, %v949
  %v951 = vpop.f32.mrb[0].mxu0
  %v952 = vpop.f32.mrb[0].mxu0
  %v953 = vadd.f32 %v857, %v952
  %v954 = vpop.f32.mrb[0].mxu0
  %955 = vmatprep.mubr.bf16.mxu0 0
  %956 = vmatmul.mubr.bf16.gmra.mrb[0].mxu0 %v825
  %v957 = vpop.f32.mrb[0].mxu0
  %v958 = vadd.f32 %v857, %v957
  %v959 = vpop.f32.mrb[0].mxu0
  %v960 = vpop.f32.mrb[0].mxu0
  %v961 = vadd.f32 %v857, %v960
  %v962 = vpop.f32.mrb[0].mxu0
  %963 = vmatprep.mubr.bf16.mxu0 0
  %964 = vmatmul.mubr.bf16.gmra.mrb[0].mxu0 %v826
  %v965 = vpop.f32.mrb[0].mxu0
  %v966 = vadd.f32 %v857, %v965
  %v967 = vpop.f32.mrb[0].mxu0
  %v968 = vpop.f32.mrb[0].mxu0
  %v969 = vadd.f32 %v857, %v968
  %v970 = vpop.f32.mrb[0].mxu0
  %971 = vmatprep.mubr.bf16.mxu0 0
  %972 = vmatmul.mubr.bf16.gmra.mrb[0].mxu0 %v827
  %v973 = vpop.f32.mrb[0].mxu0
  %v974 = vadd.f32 %v857, %v973
  %v975 = vpop.f32.mrb[0].mxu0
  %v976 = vpop.f32.mrb[0].mxu0
  %v977 = vadd.f32 %v857, %v976
  %v978 = vpop.f32.mrb[0].mxu0
  %979 = vmatprep.mubr.bf16.mxu0 0
  %980 = vmatmul.mubr.bf16.gmra.mrb[0].mxu0 %v828
  %v981 = vpop.f32.mrb[0].mxu0
  %v982 = vadd.f32 %v857, %v981
  %v983 = vpop.f32.mrb[0].mxu0
  %v984 = vpop.f32.mrb[0].mxu0
  %v985 = vadd.f32 %v857, %v984
  %v986 = vpop.f32.mrb[0].mxu0
  %987 = vmatprep.mubr.bf16.mxu0 0
  %988 = vmatmul.mubr.bf16.gmra.mrb[0].mxu0 %v829
  %v989 = vpop.f32.mrb[0].mxu0
  %v990 = vadd.f32 %v857, %v989
  %v991 = vpop.f32.mrb[0].mxu0
  %v992 = vpop.f32.mrb[0].mxu0
  %v993 = vadd.f32 %v857, %v992
  %v994 = vpop.f32.mrb[0].mxu0
  %995 = vmatprep.mubr.bf16.mxu0 0
  %996 = vmatmul.mubr.bf16.gmra.mrb[0].mxu0 %v830
  %v997 = vpop.f32.mrb[0].mxu0
  %v998 = vadd.f32 %v857, %v997
  %v999 = vpop.f32.mrb[0].mxu0
  %v1000 = vpop.f32.mrb[0].mxu0
  %v1001 = vadd.f32 %v857, %v1000
  %v1002 = vpop.f32.mrb[0].mxu0
  %1003 = vmatprep.mubr.bf16.mxu0 0
  %1004 = vmatmul.mubr.bf16.gmra.mrb[0].mxu0 %v831
  %v1005 = vpop.f32.mrb[0].mxu0
  %v1006 = vadd.f32 %v857, %v1005
  %v1007 = vpop.f32.mrb[0].mxu0
  %v1008 = vpop.f32.mrb[0].mxu0
  %v1009 = vadd.f32 %v857, %v1008
  %v1010 = vpop.f32.mrb[0].mxu0
  %1011 = vmatprep.mubr.bf16.mxu0 0
  %1012 = vmatmul.mubr.bf16.gmra.mrb[0].mxu0 %v832
  %v1013 = vpop.f32.mrb[0].mxu0
  %v1014 = vadd.f32 %v857, %v1013
  %v1015 = vpop.f32.mrb[0].mxu0
  %v1016 = vpop.f32.mrb[0].mxu0
  %v1017 = vadd.f32 %v857, %v1016
  %v1018 = vpop.f32.mrb[0].mxu0
  %1019 = vmatprep.mubr.bf16.mxu0 0
  %1020 = vmatmul.mubr.bf16.gmra.mrb[0].mxu0 %v833
  %v1021 = vpop.f32.mrb[0].mxu0
  %v1022 = vadd.f32 %v857, %v1021
  %v1023 = vpop.f32.mrb[0].mxu0
  %v1024 = vpop.f32.mrb[0].mxu0
  %v1025 = vadd.f32 %v857, %v1024
  %v1026 = vpop.f32.mrb[0].mxu0
  %1027 = vmatprep.mubr.bf16.mxu0 0
  %1028 = vmatmul.mubr.bf16.gmra.mrb[0].mxu0 %v834
  %v1029 = vpop.f32.mrb[0].mxu0
  %v1030 = vadd.f32 %v857, %v1029
  %v1031 = vpop.f32.mrb[0].mxu0
  %v1032 = vpop.f32.mrb[0].mxu0
  %v1033 = vadd.f32 %v857, %v1032
  %v1034 = vpop.f32.mrb[0].mxu0
  %1035 = vmatprep.mubr.bf16.mxu0 0
  %1036 = vmatmul.mubr.bf16.gmra.mrb[0].mxu0 %v835
  %v1037 = vpop.f32.mrb[0].mxu0
  %v1038 = vadd.f32 %v857, %v1037
  %v1039 = vpop.f32.mrb[0].mxu0
  %v1040 = vpop.f32.mrb[0].mxu0
  %v1041 = vpop.f32.mrb[0].mxu0
  %1042 = vdwg.mxu0
  %v1043 = vmax.f32 %v942, 0.0
  %v1044 = vmax.f32 %v945, 0.0
  %v1045 = vmax.f32 %v950, 0.0
  %v1046 = vmax.f32 %v953, 0.0
  %v1047 = vmax.f32 %v958, 0.0
  %v1048 = vmax.f32 %v961, 0.0
  %v1049 = vmax.f32 %v966, 0.0
  %v1050 = vmax.f32 %v969, 0.0
  %v1051 = vmax.f32 %v974, 0.0
  %v1052 = vmax.f32 %v977, 0.0
  %v1053 = vmax.f32 %v982, 0.0
  %v1054 = vmax.f32 %v985, 0.0
  %v1055 = vmax.f32 %v990, 0.0
  %v1056 = vmax.f32 %v993, 0.0
  %v1057 = vmax.f32 %v998, 0.0
  %v1058 = vmax.f32 %v1001, 0.0
  %v1059 = vmax.f32 %v1006, 0.0
  %v1060 = vmax.f32 %v1009, 0.0
  %v1061 = vmax.f32 %v1014, 0.0
  %v1062 = vmax.f32 %v1017, 0.0
  %v1063 = vmax.f32 %v1022, 0.0
  %v1064 = vmax.f32 %v1025, 0.0
  %v1065 = vmax.f32 %v1030, 0.0
  %v1066 = vmax.f32 %v1033, 0.0
  %v1067 = vmax.f32 %v1038, 0.0
  %v1068 = vpack.c.bf16 %v1044, %v1043
  %v1069 = vpack.c.bf16 %v1046, %v1045
  %v1070 = vpack.c.bf16 %v1048, %v1047
  %v1071 = vpack.c.bf16 %v1050, %v1049
  %v1072 = vpack.c.bf16 %v1052, %v1051
  %v1073 = vpack.c.bf16 %v1054, %v1053
  %v1074 = vpack.c.bf16 %v1056, %v1055
  %v1075 = vpack.c.bf16 %v1058, %v1057
  %v1076 = vpack.c.bf16 %v1060, %v1059
  %v1077 = vpack.c.bf16 %v1062, %v1061
  %v1078 = vpack.c.bf16 %v1064, %v1063
  %v1079 = vpack.c.bf16 %v1066, %v1065
  %v1080 = vpack.c.bf16 %v1067, %v1067
  %v1081 = vld [vmem:[%s7] sm:$0xf]
  %v1082 = vld [vmem:[%s7 + $0x4] sm:$0xf]
  %v1083 = vld [vmem:[%s7 + $0x8] sm:$0xf]
  %v1084 = vld [vmem:[%s7 + $0xc] sm:$0xf]
  %v1085 = vld [vmem:[%s7 + $0x10] sm:$0xf]
  %v1086 = vld [vmem:[%s7 + $0x14] sm:$0xf]
  %v1087 = vld [vmem:[%s7 + $0x18] sm:$0xf]
  %v1088 = vld [vmem:[%s7 + $0x1c] sm:$0xf]
  %v1089 = vld [vmem:[%s7 + $0x20] sm:$0xf]
  %v1090 = vld [vmem:[%s7 + $0x24] sm:$0xf]
  %v1091 = vld [vmem:[%s7 + $0x28] sm:$0xf]
  %v1092 = vld [vmem:[%s7 + $0x2c] sm:$0xf]
  %v1093 = vld [vmem:[%s7 + $0x30] sm:$0xf]
  %v1094 = vld [vmem:[%s7 + $0x34] sm:$0xf]
  %v1095 = vld [vmem:[%s7 + $0x38] sm:$0xf]
  %v1096 = vld [vmem:[%s7 + $0x3c] sm:$0xf]
  %v1097 = vld [vmem:[%s8] sm:$0x1]
  %v1099 = vlaneseq
  %v1100 = vshrl.u32 %v1099, 7
  %v1101 = vsub.s32 0, %v1100
  %v1102 = vrot.slane %v1097, %v1101
  %v1120 = vunpack.c.l.b16 %v1081
  %v1121 = vunpack.c.l.b16 %v1082
  %v1122 = vunpack.c.l.b16 %v1083
  %v1123 = vunpack.c.l.b16 %v1084
  %v1124 = vunpack.c.l.b16 %v1085
  %v1125 = vunpack.c.l.b16 %v1086
  %v1126 = vunpack.c.l.b16 %v1087
  %v1127 = vunpack.c.l.b16 %v1088
  %v1128 = vunpack.c.l.b16 %v1089
  %v1129 = vunpack.c.l.b16 %v1090
  %v1130 = vunpack.c.l.b16 %v1091
  %v1131 = vunpack.c.l.b16 %v1092
  %v1132 = vunpack.c.l.b16 %v1093
  %v1133 = vunpack.c.l.b16 %v1094
  %v1134 = vunpack.c.l.b16 %v1095
  %v1135 = vunpack.c.l.b16 %v1096
  %v1136 = vpack.c.b16 %v1121, %v1120
  %v1137 = vpack.c.b16 %v1123, %v1122
  %v1138 = vpack.c.b16 %v1125, %v1124
  %v1139 = vpack.c.b16 %v1127, %v1126
  %v1140 = vpack.c.b16 %v1129, %v1128
  %v1141 = vpack.c.b16 %v1131, %v1130
  %v1142 = vpack.c.b16 %v1133, %v1132
  %v1143 = vpack.c.b16 %v1135, %v1134
  %1152 = vmatprep.subr.bf16.mxu0 0
  %1153 = vmatpush1.bf16.msra.mxu0 %v1136
  %1154 = vmatprep.subr.bf16.mxu0 0
  %1155 = vmatpush1.bf16.msra.mxu0 %v1137
  %1156 = vmatprep.subr.bf16.mxu0 0
  %1157 = vmatpush1.bf16.msra.mxu0 %v1138
  %1158 = vmatprep.subr.bf16.mxu0 0
  %1159 = vmatpush1.bf16.msra.mxu0 %v1139
  %1160 = vmatprep.subr.bf16.mxu0 0
  %1161 = vmatpush1.bf16.msra.mxu0 %v1140
  %1162 = vmatprep.subr.bf16.mxu0 0
  %1163 = vmatpush1.bf16.msra.mxu0 %v1141
  %1164 = vmatprep.subr.bf16.mxu0 0
  %1165 = vmatpush1.bf16.msra.mxu0 %v1142
  %1166 = vmatprep.subr.bf16.mxu0 0
  %1167 = vmatpush1.bf16.msra.mxu0 %v1143
  %1168 = vmatprep.subr.bf16.mxu0 0
  %1169 = vmatpush1.bf16.msra.mxu0 0
  %1170 = vmatprep.subr.bf16.mxu0 0
  %1171 = vmatpush1.bf16.msra.mxu0 0
  %1172 = vmatprep.subr.bf16.mxu0 0
  %1173 = vmatpush1.bf16.msra.mxu0 0
  %1174 = vmatprep.subr.bf16.mxu0 0
  %1175 = vmatpush1.bf16.msra.mxu0 0
  %1176 = vmatprep.subr.bf16.mxu0 0
  %1177 = vmatpush1.bf16.msra.mxu0 0
  %1178 = vmatprep.subr.bf16.mxu0 0
  %1179 = vmatpush1.bf16.msra.mxu0 0
  %1180 = vmatprep.subr.bf16.mxu0 0
  %1181 = vmatpush1.bf16.msra.mxu0 0
  %1182 = vmatprep.subr.bf16.mxu0 0
  %1183 = vmatpush1.bf16.msra.mxu0 0
  %1184 = vmatprep.mubr.bf16.mxu0 0
  %1185 = vmatmul.mubr.bf16.gmra.mrb[0].mxu0 %v1068
  %v1186 = vpop.f32.mrb[0].mxu0
  %v1187 = vadd.f32 %v1102, %v1186
  %v1188 = vpop.f32.mrb[0].mxu0
  %v1189 = vpop.f32.mrb[0].mxu0
  %v1190 = vadd.f32 %v1102, %v1189
  %v1191 = vpop.f32.mrb[0].mxu0
  %1192 = vmatprep.mubr.bf16.mxu0 0
  %1193 = vmatmul.mubr.bf16.gmra.mrb[0].mxu0 %v1069
  %v1194 = vpop.f32.mrb[0].mxu0
  %v1195 = vadd.f32 %v1102, %v1194
  %v1196 = vpop.f32.mrb[0].mxu0
  %v1197 = vpop.f32.mrb[0].mxu0
  %v1198 = vadd.f32 %v1102, %v1197
  %v1199 = vpop.f32.mrb[0].mxu0
  %1200 = vmatprep.mubr.bf16.mxu0 0
  %1201 = vmatmul.mubr.bf16.gmra.mrb[0].mxu0 %v1070
  %v1202 = vpop.f32.mrb[0].mxu0
  %v1203 = vadd.f32 %v1102, %v1202
  %v1204 = vpop.f32.mrb[0].mxu0
  %v1205 = vpop.f32.mrb[0].mxu0
  %v1206 = vadd.f32 %v1102, %v1205
  %v1207 = vpop.f32.mrb[0].mxu0
  %1208 = vmatprep.mubr.bf16.mxu0 0
  %1209 = vmatmul.mubr.bf16.gmra.mrb[0].mxu0 %v1071
  %v1210 = vpop.f32.mrb[0].mxu0
  %v1211 = vadd.f32 %v1102, %v1210
  %v1212 = vpop.f32.mrb[0].mxu0
  %v1213 = vpop.f32.mrb[0].mxu0
  %v1214 = vadd.f32 %v1102, %v1213
  %v1215 = vpop.f32.mrb[0].mxu0
  %1216 = vmatprep.mubr.bf16.mxu0 0
  %1217 = vmatmul.mubr.bf16.gmra.mrb[0].mxu0 %v1072
  %v1218 = vpop.f32.mrb[0].mxu0
  %v1219 = vadd.f32 %v1102, %v1218
  %v1220 = vpop.f32.mrb[0].mxu0
  %v1221 = vpop.f32.mrb[0].mxu0
  %v1222 = vadd.f32 %v1102, %v1221
  %v1223 = vpop.f32.mrb[0].mxu0
  %1224 = vmatprep.mubr.bf16.mxu0 0
  %1225 = vmatmul.mubr.bf16.gmra.mrb[0].mxu0 %v1073
  %v1226 = vpop.f32.mrb[0].mxu0
  %v1227 = vadd.f32 %v1102, %v1226
  %v1228 = vpop.f32.mrb[0].mxu0
  %v1229 = vpop.f32.mrb[0].mxu0
  %v1230 = vadd.f32 %v1102, %v1229
  %v1231 = vpop.f32.mrb[0].mxu0
  %1232 = vmatprep.mubr.bf16.mxu0 0
  %1233 = vmatmul.mubr.bf16.gmra.mrb[0].mxu0 %v1074
  %v1234 = vpop.f32.mrb[0].mxu0
  %v1235 = vadd.f32 %v1102, %v1234
  %v1236 = vpop.f32.mrb[0].mxu0
  %v1237 = vpop.f32.mrb[0].mxu0
  %v1238 = vadd.f32 %v1102, %v1237
  %v1239 = vpop.f32.mrb[0].mxu0
  %1240 = vmatprep.mubr.bf16.mxu0 0
  %1241 = vmatmul.mubr.bf16.gmra.mrb[0].mxu0 %v1075
  %v1242 = vpop.f32.mrb[0].mxu0
  %v1243 = vadd.f32 %v1102, %v1242
  %v1244 = vpop.f32.mrb[0].mxu0
  %v1245 = vpop.f32.mrb[0].mxu0
  %v1246 = vadd.f32 %v1102, %v1245
  %v1247 = vpop.f32.mrb[0].mxu0
  %1248 = vmatprep.mubr.bf16.mxu0 0
  %1249 = vmatmul.mubr.bf16.gmra.mrb[0].mxu0 %v1076
  %v1250 = vpop.f32.mrb[0].mxu0
  %v1251 = vadd.f32 %v1102, %v1250
  %v1252 = vpop.f32.mrb[0].mxu0
  %v1253 = vpop.f32.mrb[0].mxu0
  %v1254 = vadd.f32 %v1102, %v1253
  %v1255 = vpop.f32.mrb[0].mxu0
  %1256 = vmatprep.mubr.bf16.mxu0 0
  %1257 = vmatmul.mubr.bf16.gmra.mrb[0].mxu0 %v1077
  %v1258 = vpop.f32.mrb[0].mxu0
  %v1259 = vadd.f32 %v1102, %v1258
  %v1260 = vpop.f32.mrb[0].mxu0
  %v1261 = vpop.f32.mrb[0].mxu0
  %v1262 = vadd.f32 %v1102, %v1261
  %v1263 = vpop.f32.mrb[0].mxu0
  %1264 = vmatprep.mubr.bf16.mxu0 0
  %1265 = vmatmul.mubr.bf16.gmra.mrb[0].mxu0 %v1078
  %v1266 = vpop.f32.mrb[0].mxu0
  %v1267 = vadd.f32 %v1102, %v1266
  %v1268 = vpop.f32.mrb[0].mxu0
  %v1269 = vpop.f32.mrb[0].mxu0
  %v1270 = vadd.f32 %v1102, %v1269
  %v1271 = vpop.f32.mrb[0].mxu0
  %1272 = vmatprep.mubr.bf16.mxu0 0
  %1273 = vmatmul.mubr.bf16.gmra.mrb[0].mxu0 %v1079
  %v1274 = vpop.f32.mrb[0].mxu0
  %v1275 = vadd.f32 %v1102, %v1274
  %v1276 = vpop.f32.mrb[0].mxu0
  %v1277 = vpop.f32.mrb[0].mxu0
  %v1278 = vadd.f32 %v1102, %v1277
  %v1279 = vpop.f32.mrb[0].mxu0
  %1280 = vmatprep.mubr.bf16.mxu0 0
  %1281 = vmatmul.mubr.bf16.gmra.mrb[0].mxu0 %v1080
  %v1282 = vpop.f32.mrb[0].mxu0
  %v1283 = vadd.f32 %v1102, %v1282
  %v1284 = vpop.f32.mrb[0].mxu0
  %v1285 = vpop.f32.mrb[0].mxu0
  %v1286 = vpop.f32.mrb[0].mxu0
  %1287 = vdwg.mxu0
  %vm1288 = vcmask 23552
  %1289 = vst.msk [vmem:[%s9] sm:$0xff] %vm1288, %v1187
  %1290 = vst.msk [vmem:[%s9 + $0x8] sm:$0xff] %vm1288, %v1190
  %1291 = vst.msk [vmem:[%s9 + $0x10] sm:$0xff] %vm1288, %v1195
  %1292 = vst.msk [vmem:[%s9 + $0x18] sm:$0xff] %vm1288, %v1198
  %1293 = vst.msk [vmem:[%s9 + $0x20] sm:$0xff] %vm1288, %v1203
  %1294 = vst.msk [vmem:[%s9 + $0x28] sm:$0xff] %vm1288, %v1206
  %1295 = vst.msk [vmem:[%s9 + $0x30] sm:$0xff] %vm1288, %v1211
  %1296 = vst.msk [vmem:[%s9 + $0x38] sm:$0xff] %vm1288, %v1214
  %1297 = vst.msk [vmem:[%s9 + $0x40] sm:$0xff] %vm1288, %v1219
  %1298 = vst.msk [vmem:[%s9 + $0x48] sm:$0xff] %vm1288, %v1222
  %1299 = vst.msk [vmem:[%s9 + $0x50] sm:$0xff] %vm1288, %v1227
  %1300 = vst.msk [vmem:[%s9 + $0x58] sm:$0xff] %vm1288, %v1230
  %1301 = vst.msk [vmem:[%s9 + $0x60] sm:$0xff] %vm1288, %v1235
  %1302 = vst.msk [vmem:[%s9 + $0x68] sm:$0xff] %vm1288, %v1238
  %1303 = vst.msk [vmem:[%s9 + $0x70] sm:$0xff] %vm1288, %v1243
  %1304 = vst.msk [vmem:[%s9 + $0x78] sm:$0xff] %vm1288, %v1246
  %1305 = vst.msk [vmem:[%s9 + $0x80] sm:$0xff] %vm1288, %v1251
  %1306 = vst.msk [vmem:[%s9 + $0x88] sm:$0xff] %vm1288, %v1254
  %1307 = vst.msk [vmem:[%s9 + $0x90] sm:$0xff] %vm1288, %v1259
  %1308 = vst.msk [vmem:[%s9 + $0x98] sm:$0xff] %vm1288, %v1262
  %1309 = vst.msk [vmem:[%s9 + $0xa0] sm:$0xff] %vm1288, %v1267
  %1310 = vst.msk [vmem:[%s9 + $0xa8] sm:$0xff] %vm1288, %v1270
  %1311 = vst.msk [vmem:[%s9 + $0xb0] sm:$0xff] %vm1288, %v1275
  %1312 = vst.msk [vmem:[%s9 + $0xb8] sm:$0xff] %vm1288, %v1278
  %1313 = vst.msk [vmem:[%s9 + $0xc0] sm:$0xff] %vm1288, %v1283
  // Predicated region
  $region38: #{point_mlp_1frame.1} parent=0 // pred_check
    _
  $region39: #{point_mlp_1frame.1} parent=0 // pred_check_branch
    %1315 = sbr.rel (0) target = $region41
  $region40: #{point_mlp_1frame.1} parent=0 // pred_region
    _
  $region41: #{point_mlp_1frame.1} parent=0 // pred_fallthru
    _
  // Predicated region
  $region42: #{point_mlp_1frame.1} parent=0 // pred_check
    _
  $region43: #{point_mlp_1frame.1} parent=0 // pred_check_branch
    %1317 = sbr.rel (0) target = $region45
  $region44: #{point_mlp_1frame.1} parent=0 // pred_region
    _
  $region45: #{point_mlp_1frame.1} parent=0 // pred_fallthru
    _

</llo_original>
